<compile_context>
chip_gen: v5e
topology: v5e:2x2
jax: 0.10.0
libtpu: 0.0.40
codegen_flags: <defaults>
</compile_context>

<pallas_src>
import functools

import jax
import jax.numpy as jnp
from jax.experimental import pallas as pl
from jax.experimental.pallas import tpu as pltpu


def _make_kernel(nb):
    def kernel(x_ref, w_ref, scale_ref, shift_ref, o_ref):
        # x_ref:     (nb, C_in, TL)   channels-first spatial tile(s)
        # w_ref:     (C_out, C_in)    conv weight in input dtype (resident)
        # scale_ref: (C_out, 1)       f32 BN scale: gamma / sqrt(var + eps)
        # shift_ref: (C_out, 1)       f32 folded conv-bias + BN shift
        # o_ref:     (nb, C_out, TL)
        w = w_ref[...]
        scale = scale_ref[...]
        shift = shift_ref[...]
        for i in range(nb):  # static unroll; nb is small
            y = jnp.dot(w, x_ref[i], preferred_element_type=jnp.float32)
            y = y * scale + shift                        # f32 epilogue (v5e-friendly)
            o_ref[i] = jnp.maximum(y, 0.0).astype(o_ref.dtype)
    return kernel


def _vmem_capacity_bytes():
    # v5e/v6e: 128 MiB physical VMEM, v7x: 64 MiB per TensorCore.
    try:
        return int(pltpu.get_tpu_info().vmem_capacity_bytes)
    except Exception:
        return 64 * 1024 * 1024  # conservative fallback, safe on every generation


@functools.partial(jax.jit, static_argnames=("tile_l",))
def linear1layer_forward(x, params, tile_l=None):
    """x: (N, C_in, L) -> (N, C_out, L) in x.dtype (eval-mode BatchNorm1d)."""
    N, C_in, L = x.shape
    w = params["w"]                               # (C_out, C_in): 1x1 conv weight, squeezed
    # TODO(synk): kernel_size > 1 (true 1-D conv with halo tiles) is not implemented;
    # the module default (and pointcloud usage) is kernel_size=1.
    C_out = w.shape[0]
    eps = 1e-5

    # ---- eval-mode BN: per-channel f32 scale / shift, applied in the kernel epilogue
    scale = params["bn_gamma"] * jax.lax.rsqrt(params["bn_var"] + eps)      # (C_out,)
    shift = (params["b"] - params["bn_mean"]) * scale + params["bn_beta"]   # (C_out,)
    scale = scale.astype(jnp.float32).reshape(C_out, 1)
    shift = shift.astype(jnp.float32).reshape(C_out, 1)
    w_k = w.astype(x.dtype)                       # bf16 inputs -> native bf16 MXU path

    in_isz = jnp.dtype(x.dtype).itemsize
    out_isz = in_isz                              # output keeps the input dtype

    # ---- per-generation VMEM policy ------------------------------------------------
    vmem_capacity = _vmem_capacity_bytes()
    # scoped limit ~3/4 of physical: 48 MiB on v7x, 96 MiB on v5e/v6e
    vmem_limit = min((vmem_capacity // 4) * 3, 100 * 1024 * 1024)
    vmem_budget = (vmem_limit // 6) * 5           # headroom under the scoped limit

    # Resident (non-tile) bytes: double-buffered weight + double-buffered scale/shift.
    resident_bytes = 2 * C_out * C_in * in_isz + 4 * C_out * 4

    def stream_bytes_per_step(nb_, tl_):
        # double-buffered x tile + double-buffered out tile + live f32 epilogue temps
        return tl_ * (2 * nb_ * C_in * in_isz
                      + 2 * nb_ * C_out * out_isz
                      + 2 * C_out * 4)

    # ---- spatial (lane) tile: as large as the VMEM budget allows ---------------------
    per_col = 2 * C_in * in_isz + 2 * C_out * out_isz + 2 * C_out * 4
    tile_budget = max(vmem_budget - resident_bytes, per_col * 128)
    tl_cap = max(128, (tile_budget // per_col) // 128 * 128)
    tl = tl_cap if tile_l is None else min(int(tile_l), tl_cap)
    if tl >= L:
        tl = L                                    # one full-width tile (== array dim)
    else:
        tl = max(128, (tl // 128) * 128)          # lane-aligned; ragged tail handled by Pallas
    num_l = pl.cdiv(L, tl)

    # ---- keep enough grid steps for megacore sharding (v7x has 2 TensorCores) -------
    MIN_GRID_STEPS = 4
    if tile_l is None and N * num_l < MIN_GRID_STEPS and L > 2 * 128:
        need_l = pl.cdiv(MIN_GRID_STEPS, N)
        cand = max(256, (L // need_l) // 128 * 128)
        if cand < tl:
            tl = cand
            num_l = pl.cdiv(L, tl)

    # ---- batch blocking: amortize per-step overhead when per-step DMAs are small ----
    nb = 1
    while True:
        if stream_bytes_per_step(nb, tl) >= (8 << 20):
            break                                  # per-step stream already large enough
        nxt = next((c for c in range(nb + 1, N + 1) if N % c == 0), None)
        if nxt is None:
            break
        if resident_bytes + stream_bytes_per_step(nxt, tl) > vmem_budget:
            break
        steps = (N // nxt) * num_l
        if steps < MIN_GRID_STEPS <= N * num_l:
            break                                  # don't starve the second TensorCore
        nb = nxt

    grid = (N // nb, num_l)                        # no jnp.pad of the activation

    out = pl.pallas_call(
        _make_kernel(nb),
        out_shape=jax.ShapeDtypeStruct((N, C_out, L), x.dtype),
        grid_spec=pltpu.PrefetchScalarGridSpec(
            num_scalar_prefetch=0,
            grid=grid,
            in_specs=[
                pl.BlockSpec((nb, C_in, tl), lambda n, l: (n, 0, l)),   # x tile
                pl.BlockSpec((C_out, C_in), lambda n, l: (0, 0)),       # weight (resident)
                pl.BlockSpec((C_out, 1), lambda n, l: (0, 0)),          # BN scale (resident)
                pl.BlockSpec((C_out, 1), lambda n, l: (0, 0)),          # bias+BN shift (resident)
            ],
            out_specs=pl.BlockSpec((nb, C_out, tl), lambda n, l: (n, 0, l)),
        ),
        compiler_params=pltpu.CompilerParams(
            dimension_semantics=("parallel", "parallel"),
            vmem_limit_bytes=int(vmem_limit),
        ),
    )(x, w_k, scale, shift)
    return out


def init_params(key, in_channels, out_channels):
    """Deterministic parameter init mirroring the module's shapes."""
    C_in, C_out = in_channels, out_channels
    ks = jax.random.split(key, 4)
    return {
        # Conv1d(C_in, C_out, 1): weight (C_out, C_in, 1) stored squeezed as (C_out, C_in)
        "w": jax.random.normal(ks[0], (C_out, C_in), jnp.float32) * 0.2,
        "b": jax.random.normal(ks[1], (C_out,), jnp.float32) * 0.1,
        "bn_gamma": 1.0 + 0.1 * jax.random.normal(ks[2], (C_out,), jnp.float32),
        "bn_beta": 0.1 * jax.random.normal(ks[3], (C_out,), jnp.float32),
        "bn_mean": jnp.linspace(-0.05, 0.05, C_out).astype(jnp.float32),
        "bn_var": jnp.linspace(0.9, 1.1, C_out).astype(jnp.float32),
    }


def _reference(x, params, eps=1e-5):
    """Plain-JAX reference of the PyTorch forward (eval-mode BatchNorm1d)."""
    xf = x.astype(jnp.float32)
    y = jnp.einsum("oc,ncl->nol", params["w"].astype(jnp.float32), xf)
    y = y + params["b"][None, :, None]
    y = (y - params["bn_mean"][None, :, None]) * (
        params["bn_gamma"][None, :, None]
        / jnp.sqrt(params["bn_var"][None, :, None] + eps)
    ) + params["bn_beta"][None, :, None]
    return jnp.maximum(y, 0.0)


if __name__ == "__main__":
    key = jax.random.PRNGKey(0)
    k1, k2, k3, k4 = jax.random.split(key, 4)

    # small shapes consistent with the module: batch=2, in_channels=4, length=16
    N, C_in, C_out, L = 2, 4, 32, 16
    x = jax.random.normal(k1, (N, C_in, L), jnp.float32)
    params = init_params(k2, C_in, C_out)
    out = jax.block_until_ready(linear1layer_forward(x, params))
    ref = _reference(x, params)
    assert out.shape == (N, C_out, L)
    assert jnp.allclose(out, ref, atol=1e-4, rtol=1e-4)

    # larger f32 case: auto (VMEM-budget / megacore-aware) spatial tiling
    N2, Ci2, Co2, L2 = 2, 64, 128, 777
    x2 = jax.random.normal(k3, (N2, Ci2, L2), jnp.float32)
    p2 = init_params(k4, Ci2, Co2)
    out2 = jax.block_until_ready(linear1layer_forward(x2, p2))
    ref2 = _reference(x2, p2)
    assert jnp.allclose(out2, ref2, atol=1e-3, rtol=1e-3)

    # explicit small spatial tile -> multi-tile grid with a ragged last tile
    out2b = jax.block_until_ready(linear1layer_forward(x2, p2, tile_l=256))
    assert jnp.allclose(out2b, ref2, atol=1e-3, rtol=1e-3)

    # bf16 input -> bf16 MXU operands, f32 accumulation + f32 BN/ReLU epilogue
    x3 = x2.astype(jnp.bfloat16)
    out3 = jax.block_until_ready(linear1layer_forward(x3, p2))
    ref3 = _reference(x3, p2)
    assert jnp.allclose(out3.astype(jnp.float32), ref3, atol=5e-2, rtol=5e-2)

    print("KERNEL_OK")
</pallas_src>

<mosaic_0001>
module attributes {stable_mosaic.version = 11 : i64} {
  func.func @kernel(%arg0: i32, %arg1: i32, %arg2: memref<2x4x16xf32, #tpu.memory_space<vmem>>, %arg3: memref<32x4xf32, #tpu.memory_space<vmem>>, %arg4: memref<32x1xf32, #tpu.memory_space<vmem>>, %arg5: memref<32x1xf32, #tpu.memory_space<vmem>>, %arg6: memref<2x32x16xf32, #tpu.memory_space<vmem>>) attributes {dimension_semantics = [#tpu.dimension_semantics<parallel>, #tpu.dimension_semantics<parallel>], iteration_bounds = array<i64: 1, 1>, scalar_prefetch = 0 : i64, scratch_operands = 0 : i64, tpu.core_type = #tpu.core_type<tc>, window_params = [{transform_indices = @transform_0, window_bounds = array<i64: 2, 4, 16>}, {pipeline_mode = #tpu.pipeline_mode<synchronous>, transform_indices = @transform_1, window_bounds = array<i64: 32, 4>}, {pipeline_mode = #tpu.pipeline_mode<synchronous>, transform_indices = @transform_2, window_bounds = array<i64: 32, 1>}, {pipeline_mode = #tpu.pipeline_mode<synchronous>, transform_indices = @transform_3, window_bounds = array<i64: 32, 1>}, {transform_indices = @transform_4, window_bounds = array<i64: 2, 32, 16>}]} {
    %c0 = arith.constant 0 : index
    %c0_0 = arith.constant 0 : index
    %0 = vector.load %arg3[%c0, %c0_0] : memref<32x4xf32, #tpu.memory_space<vmem>>, vector<32x4xf32>
    %c0_1 = arith.constant 0 : index
    %c0_2 = arith.constant 0 : index
    %1 = vector.load %arg4[%c0_1, %c0_2] : memref<32x1xf32, #tpu.memory_space<vmem>>, vector<32x1xf32>
    %c0_3 = arith.constant 0 : index
    %c0_4 = arith.constant 0 : index
    %2 = vector.load %arg5[%c0_3, %c0_4] : memref<32x1xf32, #tpu.memory_space<vmem>>, vector<32x1xf32>
    %c0_5 = arith.constant 0 : index
    %c0_6 = arith.constant 0 : index
    %c0_7 = arith.constant 0 : index
    %3 = vector.load %arg2[%c0_5, %c0_6, %c0_7] : memref<2x4x16xf32, #tpu.memory_space<vmem>>, vector<1x4x16xf32>
    %4 = vector.shape_cast %3 : vector<1x4x16xf32> to vector<4x16xf32>
    %cst = arith.constant dense<0.000000e+00> : vector<32x16xf32>
    %5 = tpu.matmul %0, %4, %cst {dimension_numbers = #tpu.dot_dimension_numbers<[1], [0], [0], [1], [0, 0, 1, 1], [], []>} : vector<32x4xf32>, vector<4x16xf32>, vector<32x16xf32> -> vector<32x16xf32>
    %6 = vector.broadcast %1 : vector<32x1xf32> to vector<32x16xf32>
    %7 = arith.mulf %5, %6 : vector<32x16xf32>
    %8 = vector.broadcast %2 : vector<32x1xf32> to vector<32x16xf32>
    %9 = arith.addf %7, %8 : vector<32x16xf32>
    %cst_8 = arith.constant 0.000000e+00 : f32
    %10 = vector.broadcast %cst_8 : f32 to vector<32x16xf32>
    %11 = arith.maximumf %9, %10 : vector<32x16xf32>
    %c0_9 = arith.constant 0 : index
    %c0_10 = arith.constant 0 : index
    %c0_11 = arith.constant 0 : index
    %12 = vector.load %arg6[%c0_9, %c0_10, %c0_11] : memref<2x32x16xf32, #tpu.memory_space<vmem>>, vector<1x32x16xf32>
    %13 = vector.shape_cast %12 : vector<1x32x16xf32> to vector<32x16xf32>
    %14 = vector.shape_cast %11 : vector<32x16xf32> to vector<1x32x16xf32>
    tpu.vector_store %arg6[%c0_9, %c0_10, %c0_11], %14 {strides = array<i32>} : memref<2x32x16xf32, #tpu.memory_space<vmem>>, vector<1x32x16xf32>,
    %c1 = arith.constant 1 : index
    %c0_12 = arith.constant 0 : index
    %c0_13 = arith.constant 0 : index
    %15 = vector.load %arg2[%c1, %c0_12, %c0_13] : memref<2x4x16xf32, #tpu.memory_space<vmem>>, vector<1x4x16xf32>
    %16 = vector.shape_cast %15 : vector<1x4x16xf32> to vector<4x16xf32>
    %cst_14 = arith.constant dense<0.000000e+00> : vector<32x16xf32>
    %17 = tpu.matmul %0, %16, %cst_14 {dimension_numbers = #tpu.dot_dimension_numbers<[1], [0], [0], [1], [0, 0, 1, 1], [], []>} : vector<32x4xf32>, vector<4x16xf32>, vector<32x16xf32> -> vector<32x16xf32>
    %18 = vector.broadcast %1 : vector<32x1xf32> to vector<32x16xf32>
    %19 = arith.mulf %17, %18 : vector<32x16xf32>
    %20 = vector.broadcast %2 : vector<32x1xf32> to vector<32x16xf32>
    %21 = arith.addf %19, %20 : vector<32x16xf32>
    %cst_15 = arith.constant 0.000000e+00 : f32
    %22 = vector.broadcast %cst_15 : f32 to vector<32x16xf32>
    %23 = arith.maximumf %21, %22 : vector<32x16xf32>
    %c1_16 = arith.constant 1 : index
    %c0_17 = arith.constant 0 : index
    %c0_18 = arith.constant 0 : index
    %24 = vector.load %arg6[%c1_16, %c0_17, %c0_18] : memref<2x32x16xf32, #tpu.memory_space<vmem>>, vector<1x32x16xf32>
    %25 = vector.shape_cast %24 : vector<1x32x16xf32> to vector<32x16xf32>
    %26 = vector.shape_cast %23 : vector<32x16xf32> to vector<1x32x16xf32>
    tpu.vector_store %arg6[%c1_16, %c0_17, %c0_18], %26 {strides = array<i32>} : memref<2x32x16xf32, #tpu.memory_space<vmem>>, vector<1x32x16xf32>,
    return
  }
  func.func @transform_0(%arg0: i32, %arg1: i32) -> (i32, i32, i32) {
    %c0_i32 = arith.constant 0 : i32
    %c0_i32_0 = arith.constant 0 : i32
    return %arg0, %c0_i32, %arg1 : i32, i32, i32
  }
  func.func @transform_1(%arg0: i32, %arg1: i32) -> (i32, i32) {
    %c0_i32 = arith.constant 0 : i32
    %c0_i32_0 = arith.constant 0 : i32
    %c0_i32_1 = arith.constant 0 : i32
    return %c0_i32, %c0_i32_0 : i32, i32
  }
  func.func @transform_2(%arg0: i32, %arg1: i32) -> (i32, i32) {
    %c0_i32 = arith.constant 0 : i32
    %c0_i32_0 = arith.constant 0 : i32
    %c0_i32_1 = arith.constant 0 : i32
    return %c0_i32, %c0_i32_0 : i32, i32
  }
  func.func @transform_3(%arg0: i32, %arg1: i32) -> (i32, i32) {
    %c0_i32 = arith.constant 0 : i32
    %c0_i32_0 = arith.constant 0 : i32
    %c0_i32_1 = arith.constant 0 : i32
    return %c0_i32, %c0_i32_0 : i32, i32
  }
  func.func @transform_4(%arg0: i32, %arg1: i32) -> (i32, i32, i32) {
    %c0_i32 = arith.constant 0 : i32
    %c0_i32_0 = arith.constant 0 : i32
    return %arg0, %c0_i32, %arg1 : i32, i32, i32
  }
}

</mosaic_0001>

<llo_original>
// kernel: linear1layer_forward.1
$region0: #{linear1layer_forward.1}
  #allocation0 [shape = 'u32[]', space=smem, size = 0x4, offset = 0x4, fixed_abs, tag = 'smem constant byte address 0x4 - core index']
  #allocation1 [shape = 'u32[72,128]{1,0:T(1,128)}', space=vmem, size = 0x9000, scoped, tag = 'internal scratch']
  %s0 = inlined_call_operand.vmem [shape: f32[2,4,16], index: 0, kind: input, shape index: {}]
  %s1 = inlined_call_operand.vmem [shape: f32[32,4], index: 1, kind: input, shape index: {}]
  %s2 = inlined_call_operand.vmem [shape: f32[32,1], index: 2, kind: input, shape index: {}]
  %s3 = inlined_call_operand.vmem [shape: f32[32,1], index: 3, kind: input, shape index: {}]
  %s4 = inlined_call_operand.vmem [shape: f32[2,32,16], index: 4, kind: output, shape index: {}]
  %s5 = sld [smem:[#allocation0]]
  $region26: #{linear1layer_forward.1} parent=0
    _
  %s7 = ssub.s32 1, %s5
  %s8 = scalar_select 0, %s7, %s5
  // Predicated region
  $region2: #{linear1layer_forward.1} parent=0 // pred_check
    _
  $region3: #{linear1layer_forward.1} parent=0 // pred_check_branch
    %10 = sbr.rel (0) target = $region5
  $region4: #{linear1layer_forward.1} parent=0 // pred_region
    _
  $region5: #{linear1layer_forward.1} parent=0 // pred_fallthru
    _
  // Predicated region
  $region6: #{linear1layer_forward.1} parent=0 // pred_check
    _
  $region7: #{linear1layer_forward.1} parent=0 // pred_check_branch
    %12 = sbr.rel (0) target = $region9
  $region8: #{linear1layer_forward.1} parent=0 // pred_region
    _
  $region9: #{linear1layer_forward.1} parent=0 // pred_fallthru
    _
  // Predicated region
  $region10: #{linear1layer_forward.1} parent=0 // pred_check
    _
  $region11: #{linear1layer_forward.1} parent=0 // pred_check_branch
    %14 = sbr.rel (0) target = $region13
  $region12: #{linear1layer_forward.1} parent=0 // pred_region
    _
  $region13: #{linear1layer_forward.1} parent=0 // pred_fallthru
    _
  // Predicated region
  $region14: #{linear1layer_forward.1} parent=0 // pred_check
    _
  $region15: #{linear1layer_forward.1} parent=0 // pred_check_branch
    %16 = sbr.rel (0) target = $region17
  $region16: #{linear1layer_forward.1} parent=0 // pred_region
    _
  $region17: #{linear1layer_forward.1} parent=0 // pred_fallthru
    _
  %v17 = vld [vmem:[%s1] sm:$0xff]
  %v18 = vld [vmem:[%s1 + $0x8] sm:$0xff]
  %v19 = vld [vmem:[%s1 + $0x10] sm:$0xff]
  %v20 = vld [vmem:[%s1 + $0x18] sm:$0xff]
  %v21 = vld [vmem:[%s2] sm:$0xff]
  %v22 = vld [vmem:[%s2 + $0x8] sm:$0xff]
  %v23 = vld [vmem:[%s2 + $0x10] sm:$0xff]
  %v24 = vld [vmem:[%s2 + $0x18] sm:$0xff]
  %v25 = vld [vmem:[%s3] sm:$0xff]
  %v26 = vld [vmem:[%s3 + $0x8] sm:$0xff]
  %v27 = vld [vmem:[%s3 + $0x10] sm:$0xff]
  %v28 = vld [vmem:[%s3 + $0x18] sm:$0xff]
  %v29 = vld [vmem:[%s0] sm:$0xf]
  %vm30 = vcmask 31744
  %v32 = vsel %vm30, %v17, 0
  %v35 = vsel %vm30, %v18, 0
  %v38 = vsel %vm30, %v19, 0
  %v41 = vsel %vm30, %v20, 0
  %vm43 = vcmask 1043456
  %v45 = vsel %vm43, %v29, 0
  %47 = vmatpush.msra.mxu0 0.0
  %48 = vmatpush.msra.mxu0 0.0
  %49 = vmatpush.msra.mxu0 0.0
  %50 = vmatpush.msra.mxu0 0.0
  %51 = vmatpush.msra.mxu0 0.0
  %52 = vmatpush.msra.mxu0 0.0
  %53 = vmatpush.msra.mxu0 0.0
  %54 = vmatpush.msra.mxu0 0.0
  %55 = vmatpush.msra.mxu0 0.0
  %56 = vmatpush.msra.mxu0 0.0
  %57 = vmatpush.msra.mxu0 0.0
  %58 = vmatpush.msra.mxu0 0.0
  %59 = vmatpush.msra.mxu0 0.0
  %60 = vmatpush.msra.mxu0 0.0
  %61 = vmatpush.msra.mxu0 0.0
  %62 = vmatpush.msra.mxu0 %v45
  %63 = vmatmul.f32.gmra.mxu0 %v32
  %v64 = vpop.f32.mrf.mxu0
  %v65 = vadd.f32 0.0, %v64
  %66 = vmatmul.f32.gmra.mxu0 %v35
  %v67 = vpop.f32.mrf.mxu0
  %v68 = vadd.f32 0.0, %v67
  %69 = vmatmul.f32.gmra.mxu0 %v38
  %v70 = vpop.f32.mrf.mxu0
  %v71 = vadd.f32 0.0, %v70
  %72 = vmatmul.f32.gmra.mxu0 %v41
  %v73 = vpop.f32.mrf.mxu0
  %v74 = vadd.f32 0.0, %v73
  %75 = vdwg.mxu0
  %77 = vset.pattern.permute.xlu0 0
  %78 = vperm.xlu0 %77, %v21
  %v79 = vpop.permute.xlu0 %78
  %82 = vset.pattern.permute.xlu0 0
  %83 = vperm.xlu0 %82, %v22
  %v84 = vpop.permute.xlu0 %83
  %87 = vset.pattern.permute.xlu0 0
  %88 = vperm.xlu0 %87, %v23
  %v89 = vpop.permute.xlu0 %88
  %92 = vset.pattern.permute.xlu0 0
  %93 = vperm.xlu0 %92, %v24
  %v94 = vpop.permute.xlu0 %93
  %v96 = vmul.f32 %v65, %v79
  %v97 = vmul.f32 %v68, %v84
  %v98 = vmul.f32 %v71, %v89
  %v99 = vmul.f32 %v74, %v94
  %101 = vset.pattern.permute.xlu0 0
  %102 = vperm.xlu0 %101, %v25
  %v103 = vpop.permute.xlu0 %102
  %106 = vset.pattern.permute.xlu0 0
  %107 = vperm.xlu0 %106, %v26
  %v108 = vpop.permute.xlu0 %107
  %111 = vset.pattern.permute.xlu0 0
  %112 = vperm.xlu0 %111, %v27
  %v113 = vpop.permute.xlu0 %112
  %116 = vset.pattern.permute.xlu0 0
  %117 = vperm.xlu0 %116, %v28
  %v118 = vpop.permute.xlu0 %117
  %v120 = vadd.f32 %v96, %v103
  %v121 = vadd.f32 %v97, %v108
  %v122 = vadd.f32 %v98, %v113
  %v123 = vadd.f32 %v99, %v118
  %v124 = vmax.f32 %v120, 0.0
  %v125 = vmax.f32 %v121, 0.0
  %v126 = vmax.f32 %v122, 0.0
  %v127 = vmax.f32 %v123, 0.0
  %vm128 = vcmask 130048
  %129 = vst.msk [vmem:[%s4] sm:$0xff] %vm128, %v124
  %130 = vst.msk [vmem:[%s4 + $0x8] sm:$0xff] %vm128, %v125
  %131 = vst.msk [vmem:[%s4 + $0x10] sm:$0xff] %vm128, %v126
  %132 = vst.msk [vmem:[%s4 + $0x18] sm:$0xff] %vm128, %v127
  %s133 = scalar_lea.vmem %s0, 4
  %v134 = vld [vmem:[%s133] sm:$0xf]
  %v136 = vsel %vm43, %v134, 0
  %138 = vmatpush.msra.mxu0 0.0
  %139 = vmatpush.msra.mxu0 0.0
  %140 = vmatpush.msra.mxu0 0.0
  %141 = vmatpush.msra.mxu0 0.0
  %142 = vmatpush.msra.mxu0 0.0
  %143 = vmatpush.msra.mxu0 0.0
  %144 = vmatpush.msra.mxu0 0.0
  %145 = vmatpush.msra.mxu0 0.0
  %146 = vmatpush.msra.mxu0 0.0
  %147 = vmatpush.msra.mxu0 0.0
  %148 = vmatpush.msra.mxu0 0.0
  %149 = vmatpush.msra.mxu0 0.0
  %150 = vmatpush.msra.mxu0 0.0
  %151 = vmatpush.msra.mxu0 0.0
  %152 = vmatpush.msra.mxu0 0.0
  %153 = vmatpush.msra.mxu0 %v136
  %154 = vmatmul.f32.gmra.mxu0 %v32
  %v155 = vpop.f32.mrf.mxu0
  %v156 = vadd.f32 0.0, %v155
  %157 = vmatmul.f32.gmra.mxu0 %v35
  %v158 = vpop.f32.mrf.mxu0
  %v159 = vadd.f32 0.0, %v158
  %160 = vmatmul.f32.gmra.mxu0 %v38
  %v161 = vpop.f32.mrf.mxu0
  %v162 = vadd.f32 0.0, %v161
  %163 = vmatmul.f32.gmra.mxu0 %v41
  %v164 = vpop.f32.mrf.mxu0
  %v165 = vadd.f32 0.0, %v164
  %166 = vdwg.mxu0
  %v167 = vmul.f32 %v156, %v79
  %v168 = vmul.f32 %v159, %v84
  %v169 = vmul.f32 %v162, %v89
  %v170 = vmul.f32 %v165, %v94
  %v171 = vadd.f32 %v167, %v103
  %v172 = vadd.f32 %v168, %v108
  %v173 = vadd.f32 %v169, %v113
  %v174 = vadd.f32 %v170, %v118
  %v175 = vmax.f32 %v171, 0.0
  %v176 = vmax.f32 %v172, 0.0
  %v177 = vmax.f32 %v173, 0.0
  %v178 = vmax.f32 %v174, 0.0
  %s179 = scalar_lea.vmem %s4, 32
  %180 = vst.msk [vmem:[%s179] sm:$0xff] %vm128, %v175
  %181 = vst.msk [vmem:[%s179 + $0x8] sm:$0xff] %vm128, %v176
  %182 = vst.msk [vmem:[%s179 + $0x10] sm:$0xff] %vm128, %v177
  %183 = vst.msk [vmem:[%s179 + $0x18] sm:$0xff] %vm128, %v178
  // Predicated region
  $region18: #{linear1layer_forward.1} parent=0 // pred_check
    _
  $region19: #{linear1layer_forward.1} parent=0 // pred_check_branch
    %185 = sbr.rel (0) target = $region21
  $region20: #{linear1layer_forward.1} parent=0 // pred_region
    _
  $region21: #{linear1layer_forward.1} parent=0 // pred_fallthru
    _
  // Predicated region
  $region22: #{linear1layer_forward.1} parent=0 // pred_check
    _
  $region23: #{linear1layer_forward.1} parent=0 // pred_check_branch
    %187 = sbr.rel (0) target = $region25
  $region24: #{linear1layer_forward.1} parent=0 // pred_region
    _
  $region25: #{linear1layer_forward.1} parent=0 // pred_fallthru
    _

</llo_original>
